<compile_context>
chip_gen: v7x
topology: tpu7x:2x2x1
jax: 0.10.0
libtpu: 0.0.40
codegen_flags: <defaults>
</compile_context>

<pallas_src>
import jax
import jax.numpy as jnp
from jax.experimental import pallas as pl
from jax.experimental.pallas import tpu as pltpu

H_PAD = 128          # hidden size padded to one full lane width
SUBLANE_BF16 = 16    # bf16 sublane packing


def _round_up(x, m):
    return (x + m - 1) // m * m


def critic_kernel(state_ref, action_ref,
                  w1_ref, b1_ref,
                  w2h_ref, w2a_ref, b2_ref,
                  w3t_ref, b3_ref,
                  out_ref):
    # fc1 + relu : [TM, S] @ [S, H_PAD] -> f32 acc
    h1 = jnp.dot(state_ref[...], w1_ref[...], preferred_element_type=jnp.float32)
    h1 = jnp.maximum(h1 + b1_ref[...], 0.0).astype(jnp.bfloat16)

    # fc2 on cat([h1, action]) without materializing the concat:
    #   cat([h1, a]) @ W2  ==  h1 @ W2h  +  a @ W2a     (W2 pre-split into two resident arrays)
    h2 = jnp.dot(h1, w2h_ref[...], preferred_element_type=jnp.float32)
    h2 = h2 + jnp.dot(action_ref[...], w2a_ref[...], preferred_element_type=jnp.float32)
    h2 = jnp.maximum(h2 + b2_ref[...], 0.0).astype(jnp.bfloat16)

    # fc3 + sigmoid, computed transposed so the output tile is lane-dense:
    #   [O, H_PAD] x [TM, H_PAD] (contract H_PAD) -> [O, TM]
    logits_t = jax.lax.dot_general(
        w3t_ref[...], h2, (((1,), (1,)), ((), ())),
        preferred_element_type=jnp.float32)
    out_ref[...] = jax.nn.sigmoid(logits_t + b3_ref[...]).astype(out_ref.dtype)


def critic_forward(state, action, params, *, tile_m=2048):
    """state: [B, state_dim] f32, action: [B, act_feat] f32 -> [B, out_size] f32."""
    w1, b1, w2h, w2a, b2, w3t, b3 = params
    B, state_dim = state.shape
    act_feat = action.shape[1]
    act_pad = w2a.shape[0]
    out_size = w3t.shape[0]

    # Batch tile: big enough to amortize per-step overhead, small enough for VMEM everywhere.
    TM = tile_m if B >= tile_m else max(SUBLANE_BF16, _round_up(B, SUBLANE_BF16))
    B_pad = _round_up(B, TM)
    grid = (B_pad // TM,)

    # Streamed operands: bf16, zero-padded batch rows (+ action features act_feat -> act_pad).
    state_p = jnp.zeros((B_pad, state_dim), jnp.bfloat16).at[:B].set(
        state.astype(jnp.bfloat16))
    action_p = jnp.zeros((B_pad, act_pad), jnp.bfloat16).at[:B, :act_feat].set(
        action.astype(jnp.bfloat16))

    resident = lambda shape: pl.BlockSpec(shape, lambda i: (0, 0))
    in_specs = [
        pl.BlockSpec((TM, state_dim), lambda i: (i, 0)),   # state  (streamed)
        pl.BlockSpec((TM, act_pad), lambda i: (i, 0)),     # action (streamed)
        resident(w1.shape), resident(b1.shape),
        resident(w2h.shape), resident(w2a.shape), resident(b2.shape),
        resident(w3t.shape), resident(b3.shape),
    ]
    out_spec = pl.BlockSpec((out_size, TM), lambda i: (0, i))  # lane-dense (last dim = TM)

    flops = 2 * B_pad * (state_dim * H_PAD + H_PAD * H_PAD
                         + act_pad * H_PAD + H_PAD * out_size)
    bytes_accessed = (B_pad * (state_dim + act_pad) * 2           # bf16 streamed inputs
                      + B_pad * out_size * 4                      # f32 output
                      + (w1.size + w2h.size + w2a.size + w3t.size) * 2   # bf16 weights
                      + (b1.size + b2.size + b3.size) * 4)        # f32 biases
    cost = pl.CostEstimate(flops=flops,
                           transcendentals=B_pad * out_size,
                           bytes_accessed=bytes_accessed)

    out_t = pl.pallas_call(
        critic_kernel,
        out_shape=jax.ShapeDtypeStruct((out_size, B_pad), jnp.float32),
        grid=grid,
        in_specs=in_specs,
        out_specs=out_spec,
        compiler_params=pltpu.CompilerParams(
            dimension_semantics=("parallel",)),
        cost_estimate=cost,
    )(state_p, action_p, w1, b1, w2h, w2a, b2, w3t, b3)

    return out_t[:, :B].T  # [B, out_size]


def init_params(key, state_dim, act_feat, hidden_size, output_size=1):
    """PyTorch-style uniform(+-1/sqrt(fan_in)) init, then pad hidden->128, split fc2's weight
    into its hidden and action halves, and cast weights to bf16.  Padding is exact zeros, so
    the forward math is unchanged."""
    action_dim = hidden_size + act_feat   # fc2 in_features in the PyTorch module
    keys = jax.random.split(key, 6)

    def lin(kw, kb, fan_in, fan_out):
        bound = 1.0 / jnp.sqrt(jnp.float32(fan_in))
        w = jax.random.uniform(kw, (fan_in, fan_out), jnp.float32, -bound, bound)
        b = jax.random.uniform(kb, (fan_out,), jnp.float32, -bound, bound)
        return w, b

    w1, b1 = lin(keys[0], keys[1], state_dim, hidden_size)    # [S, H]
    w2, b2 = lin(keys[2], keys[3], action_dim, hidden_size)   # [H+A, H]
    w3, b3 = lin(keys[4], keys[5], hidden_size, output_size)  # [H, O]

    act_pad = _round_up(act_feat, SUBLANE_BF16)

    w1_p = jnp.zeros((state_dim, H_PAD), jnp.float32).at[:, :hidden_size].set(w1)
    b1_p = jnp.zeros((1, H_PAD), jnp.float32).at[0, :hidden_size].set(b1)

    # Split fc2's weight: rows [0:H) multiply the hidden activations, rows [H:H+A) the action.
    w2h_p = jnp.zeros((H_PAD, H_PAD), jnp.float32).at[:hidden_size, :hidden_size].set(
        w2[:hidden_size])
    w2a_p = jnp.zeros((act_pad, H_PAD), jnp.float32).at[:act_feat, :hidden_size].set(
        w2[hidden_size:])
    b2_p = jnp.zeros((1, H_PAD), jnp.float32).at[0, :hidden_size].set(b2)

    w3t_p = jnp.zeros((output_size, H_PAD), jnp.float32).at[:, :hidden_size].set(w3.T)
    b3_p = b3.reshape(output_size, 1)

    return (w1_p.astype(jnp.bfloat16), b1_p,
            w2h_p.astype(jnp.bfloat16), w2a_p.astype(jnp.bfloat16), b2_p,
            w3t_p.astype(jnp.bfloat16), b3_p)


def _reference_forward(state, action, params):
    """Pure-JAX reference using the same (bf16-rounded, padded) params."""
    w1, b1, w2h, w2a, b2, w3t, b3 = [p.astype(jnp.float32) for p in params]
    act_pad = w2a.shape[0]
    a_p = jnp.zeros((state.shape[0], act_pad), jnp.float32).at[:, :action.shape[1]].set(action)
    h1 = jnp.maximum(state @ w1 + b1, 0.0)
    h2 = jnp.maximum(h1 @ w2h + a_p @ w2a + b2, 0.0)
    return jax.nn.sigmoid(h2 @ w3t.T + b3.T)


if __name__ == "__main__":
    state_dim, act_feat, hidden_size, output_size = 16, 8, 32, 1
    B = 2

    key = jax.random.PRNGKey(0)
    k_state, k_action, k_params = jax.random.split(key, 3)

    state = jax.random.normal(k_state, (B, state_dim), jnp.float32)
    action = jax.random.normal(k_action, (B, act_feat), jnp.float32)
    params = init_params(k_params, state_dim, act_feat, hidden_size, output_size)

    out = critic_forward(state, action, params)
    jax.block_until_ready(out)

    assert out.shape == (B, output_size)
    assert bool(jnp.all((out >= 0.0) & (out <= 1.0)))

    ref = _reference_forward(state, action, params)
    assert bool(jnp.all(jnp.abs(out - ref) < 5e-2)), "mismatch vs pure-JAX reference"

    print("KERNEL_OK")
</pallas_src>

<mosaic_0001>
module attributes {stable_mosaic.version = 11 : i64} {
  func.func @critic_kernel(%arg0: i32, %arg1: memref<16x16xbf16, #tpu.memory_space<vmem>>, %arg2: memref<16x16xbf16, #tpu.memory_space<vmem>>, %arg3: memref<16x128xbf16, #tpu.memory_space<vmem>>, %arg4: memref<1x128xf32, #tpu.memory_space<vmem>>, %arg5: memref<128x128xbf16, #tpu.memory_space<vmem>>, %arg6: memref<16x128xbf16, #tpu.memory_space<vmem>>, %arg7: memref<1x128xf32, #tpu.memory_space<vmem>>, %arg8: memref<1x128xbf16, #tpu.memory_space<vmem>>, %arg9: memref<1x1xf32, #tpu.memory_space<vmem>>, %arg10: memref<1x16xf32, #tpu.memory_space<vmem>>) attributes {dimension_semantics = [#tpu.dimension_semantics<parallel>], iteration_bounds = array<i64: 1>, scalar_prefetch = 0 : i64, scratch_operands = 0 : i64, tpu.core_type = #tpu.core_type<tc>, window_params = [{transform_indices = @transform_0, window_bounds = array<i64: 16, 16>}, {transform_indices = @transform_1, window_bounds = array<i64: 16, 16>}, {pipeline_mode = #tpu.pipeline_mode<synchronous>, transform_indices = @transform_2, window_bounds = array<i64: 16, 128>}, {pipeline_mode = #tpu.pipeline_mode<synchronous>, transform_indices = @transform_3, window_bounds = array<i64: 1, 128>}, {pipeline_mode = #tpu.pipeline_mode<synchronous>, transform_indices = @transform_4, window_bounds = array<i64: 128, 128>}, {pipeline_mode = #tpu.pipeline_mode<synchronous>, transform_indices = @transform_5, window_bounds = array<i64: 16, 128>}, {pipeline_mode = #tpu.pipeline_mode<synchronous>, transform_indices = @transform_6, window_bounds = array<i64: 1, 128>}, {pipeline_mode = #tpu.pipeline_mode<synchronous>, transform_indices = @transform_7, window_bounds = array<i64: 1, 128>}, {pipeline_mode = #tpu.pipeline_mode<synchronous>, transform_indices = @transform_8, window_bounds = array<i64: 1, 1>}, {transform_indices = @transform_9, window_bounds = array<i64: 1, 16>}]} {
    %c0 = arith.constant 0 : index
    %c0_0 = arith.constant 0 : index
    %0 = vector.load %arg1[%c0, %c0_0] : memref<16x16xbf16, #tpu.memory_space<vmem>>, vector<16x16xbf16>
    %c0_1 = arith.constant 0 : index
    %c0_2 = arith.constant 0 : index
    %1 = vector.load %arg3[%c0_1, %c0_2] : memref<16x128xbf16, #tpu.memory_space<vmem>>, vector<16x128xbf16>
    %cst = arith.constant dense<0.000000e+00> : vector<16x128xf32>
    %2 = tpu.matmul %0, %1, %cst {dimension_numbers = #tpu.dot_dimension_numbers<[1], [0], [0], [1], [0, 0, 1, 1], [], []>} : vector<16x16xbf16>, vector<16x128xbf16>, vector<16x128xf32> -> vector<16x128xf32>
    %c0_3 = arith.constant 0 : index
    %c0_4 = arith.constant 0 : index
    %3 = vector.load %arg4[%c0_3, %c0_4] : memref<1x128xf32, #tpu.memory_space<vmem>>, vector<1x128xf32>
    %4 = vector.broadcast %3 : vector<1x128xf32> to vector<16x128xf32>
    %5 = arith.addf %2, %4 : vector<16x128xf32>
    %cst_5 = arith.constant 0.000000e+00 : f32
    %6 = vector.broadcast %cst_5 : f32 to vector<16x128xf32>
    %7 = arith.maximumf %5, %6 : vector<16x128xf32>
    %8 = arith.truncf %7 : vector<16x128xf32> to vector<16x128xbf16>
    %c0_6 = arith.constant 0 : index
    %c0_7 = arith.constant 0 : index
    %9 = vector.load %arg5[%c0_6, %c0_7] : memref<128x128xbf16, #tpu.memory_space<vmem>>, vector<128x128xbf16>
    %cst_8 = arith.constant dense<0.000000e+00> : vector<16x128xf32>
    %10 = tpu.matmul %8, %9, %cst_8 {dimension_numbers = #tpu.dot_dimension_numbers<[1], [0], [0], [1], [0, 0, 1, 1], [], []>} : vector<16x128xbf16>, vector<128x128xbf16>, vector<16x128xf32> -> vector<16x128xf32>
    %c0_9 = arith.constant 0 : index
    %c0_10 = arith.constant 0 : index
    %11 = vector.load %arg2[%c0_9, %c0_10] : memref<16x16xbf16, #tpu.memory_space<vmem>>, vector<16x16xbf16>
    %c0_11 = arith.constant 0 : index
    %c0_12 = arith.constant 0 : index
    %12 = vector.load %arg6[%c0_11, %c0_12] : memref<16x128xbf16, #tpu.memory_space<vmem>>, vector<16x128xbf16>
    %cst_13 = arith.constant dense<0.000000e+00> : vector<16x128xf32>
    %13 = tpu.matmul %11, %12, %cst_13 {dimension_numbers = #tpu.dot_dimension_numbers<[1], [0], [0], [1], [0, 0, 1, 1], [], []>} : vector<16x16xbf16>, vector<16x128xbf16>, vector<16x128xf32> -> vector<16x128xf32>
    %14 = arith.addf %10, %13 : vector<16x128xf32>
    %c0_14 = arith.constant 0 : index
    %c0_15 = arith.constant 0 : index
    %15 = vector.load %arg7[%c0_14, %c0_15] : memref<1x128xf32, #tpu.memory_space<vmem>>, vector<1x128xf32>
    %16 = vector.broadcast %15 : vector<1x128xf32> to vector<16x128xf32>
    %17 = arith.addf %14, %16 : vector<16x128xf32>
    %cst_16 = arith.constant 0.000000e+00 : f32
    %18 = vector.broadcast %cst_16 : f32 to vector<16x128xf32>
    %19 = arith.maximumf %17, %18 : vector<16x128xf32>
    %20 = arith.truncf %19 : vector<16x128xf32> to vector<16x128xbf16>
    %c0_17 = arith.constant 0 : index
    %c0_18 = arith.constant 0 : index
    %21 = vector.load %arg8[%c0_17, %c0_18] : memref<1x128xbf16, #tpu.memory_space<vmem>>, vector<1x128xbf16>
    %cst_19 = arith.constant dense<0.000000e+00> : vector<1x16xf32>
    %22 = tpu.matmul %21, %20, %cst_19 {dimension_numbers = #tpu.dot_dimension_numbers<[1], [1], [0], [0], [0, 0, 1, 0], [], []>} : vector<1x128xbf16>, vector<16x128xbf16>, vector<1x16xf32> -> vector<1x16xf32>
    %c0_20 = arith.constant 0 : index
    %c0_21 = arith.constant 0 : index
    %23 = vector.load %arg9[%c0_20, %c0_21] : memref<1x1xf32, #tpu.memory_space<vmem>>, vector<1x1xf32>
    %24 = vector.broadcast %23 : vector<1x1xf32> to vector<1x16xf32>
    %25 = arith.addf %22, %24 : vector<1x16xf32>
    %26 = arith.negf %25 : vector<1x16xf32>
    %27 = math.exp %26 : vector<1x16xf32>
    %cst_22 = arith.constant 1.000000e+00 : f32
    %28 = vector.broadcast %cst_22 : f32 to vector<1x16xf32>
    %29 = arith.addf %28, %27 : vector<1x16xf32>
    %30 = arith.divf %28, %29 : vector<1x16xf32>
    %c0_23 = arith.constant 0 : index
    %c0_24 = arith.constant 0 : index
    %31 = vector.load %arg10[%c0_23, %c0_24] : memref<1x16xf32, #tpu.memory_space<vmem>>, vector<1x16xf32>
    tpu.vector_store %arg10[%c0_23, %c0_24], %30 {strides = array<i32>} : memref<1x16xf32, #tpu.memory_space<vmem>>, vector<1x16xf32>,
    return
  }
  func.func @transform_0(%arg0: i32) -> (i32, i32) {
    %c0_i32 = arith.constant 0 : i32
    %c0_i32_0 = arith.constant 0 : i32
    return %arg0, %c0_i32 : i32, i32
  }
  func.func @transform_1(%arg0: i32) -> (i32, i32) {
    %c0_i32 = arith.constant 0 : i32
    %c0_i32_0 = arith.constant 0 : i32
    return %arg0, %c0_i32 : i32, i32
  }
  func.func @transform_2(%arg0: i32) -> (i32, i32) {
    %c0_i32 = arith.constant 0 : i32
    %c0_i32_0 = arith.constant 0 : i32
    %c0_i32_1 = arith.constant 0 : i32
    return %c0_i32, %c0_i32_0 : i32, i32
  }
  func.func @transform_3(%arg0: i32) -> (i32, i32) {
    %c0_i32 = arith.constant 0 : i32
    %c0_i32_0 = arith.constant 0 : i32
    %c0_i32_1 = arith.constant 0 : i32
    return %c0_i32, %c0_i32_0 : i32, i32
  }
  func.func @transform_4(%arg0: i32) -> (i32, i32) {
    %c0_i32 = arith.constant 0 : i32
    %c0_i32_0 = arith.constant 0 : i32
    %c0_i32_1 = arith.constant 0 : i32
    return %c0_i32, %c0_i32_0 : i32, i32
  }
  func.func @transform_5(%arg0: i32) -> (i32, i32) {
    %c0_i32 = arith.constant 0 : i32
    %c0_i32_0 = arith.constant 0 : i32
    %c0_i32_1 = arith.constant 0 : i32
    return %c0_i32, %c0_i32_0 : i32, i32
  }
  func.func @transform_6(%arg0: i32) -> (i32, i32) {
    %c0_i32 = arith.constant 0 : i32
    %c0_i32_0 = arith.constant 0 : i32
    %c0_i32_1 = arith.constant 0 : i32
    return %c0_i32, %c0_i32_0 : i32, i32
  }
  func.func @transform_7(%arg0: i32) -> (i32, i32) {
    %c0_i32 = arith.constant 0 : i32
    %c0_i32_0 = arith.constant 0 : i32
    %c0_i32_1 = arith.constant 0 : i32
    return %c0_i32, %c0_i32_0 : i32, i32
  }
  func.func @transform_8(%arg0: i32) -> (i32, i32) {
    %c0_i32 = arith.constant 0 : i32
    %c0_i32_0 = arith.constant 0 : i32
    %c0_i32_1 = arith.constant 0 : i32
    return %c0_i32, %c0_i32_0 : i32, i32
  }
  func.func @transform_9(%arg0: i32) -> (i32, i32) {
    %c0_i32 = arith.constant 0 : i32
    %c0_i32_0 = arith.constant 0 : i32
    return %c0_i32, %arg0 : i32, i32
  }
}

</mosaic_0001>

<llo_original>
// kernel: tpu_custom_call.1
$region0: #{tpu_custom_call.1}
  #allocation0 [shape = 'u32[]', space=smem, size = 0x4, offset = 0x4, fixed_abs, tag = 'smem constant byte address 0x4 - core index']
  #allocation1 [shape = 'u32[144,128]{1,0:T(1,128)}', space=vmem, size = 0x12000, scoped, tag = 'internal scratch']
  #allocation2 [shape = 'f32[1,1]{1,0:T(1,128)S(1)}', space=vmem, size = 0x200, scoped, tag = 'scoped memory for tpu_custom_call.1']
  %s0 = inlined_call_operand.hbm [shape: bf16[16,16], index: 0, kind: input, shape index: {}]
  %s1 = inlined_call_operand.hbm [shape: bf16[16,16], index: 1, kind: input, shape index: {}]
  %s2 = inlined_call_operand.vmem [shape: bf16[16,128], index: 2, kind: input, shape index: {}]
  %s3 = inlined_call_operand.vmem [shape: f32[1,128], index: 3, kind: input, shape index: {}]
  %s4 = inlined_call_operand.hbm [shape: bf16[128,128], index: 4, kind: input, shape index: {}]
  %s5 = inlined_call_operand.vmem [shape: bf16[16,128], index: 5, kind: input, shape index: {}]
  %s6 = inlined_call_operand.vmem [shape: f32[1,128], index: 6, kind: input, shape index: {}]
  %s7 = inlined_call_operand.vmem [shape: bf16[1,128], index: 7, kind: input, shape index: {}]
  %s8 = inlined_call_operand.<no memory space> [shape: f32[1,1], index: 8, kind: input, shape index: {}]
  %s9 = inlined_call_operand.hbm [shape: f32[1,16], index: 9, kind: output, shape index: {}]
  %s10 = sld [smem:[#allocation0]]
  $region58: #{tpu_custom_call.1} parent=0
    _
  %s12 = ssub.s32 1, %s10
  %s13 = scalar_select 0, %s12, %s10
  %v14 = vstv %s8
  %15 = vst [vmem:[#allocation2] sm:$0x1] %v14
  $region1: #{tpu_custom_call.1} parent=0
    #allocation3 [shape = 'u8[4096]{0}', space=vmem, size = 0x1000, scoped, tag = 'input window, operand 0, single buffered']
    #allocation4 [shape = 's32[1]{0}', space=sflag, size = 0x4, scoped, tag = 'scoped memory for tpu_custom_call.1']
    #allocation5 [shape = 's32[1]{0}', space=sflag, size = 0x4, scoped, tag = 'scoped memory for tpu_custom_call.1']
    #allocation6 [shape = 'u8[4096]{0}', space=vmem, size = 0x1000, scoped, tag = 'input window, operand 1, single buffered']
    #allocation7 [shape = 's32[1]{0}', space=sflag, size = 0x4, scoped, tag = 'scoped memory for tpu_custom_call.1']
    #allocation8 [shape = 'u8[32768]{0}', space=vmem, size = 0x8000, scoped, tag = 'input window, operand 4, single buffered']
    #allocation9 [shape = 'u8[512]{0}', space=vmem, size = 0x400, scoped, tag = 'output window, operand 0, single buffered']
    %16 = vsyncpa [#allocation4], 0
    %17 = vsyncpa [#allocation7], 0
    %18 = vsyncpa [#allocation5], 0
    // Predicated region
    $region2: #{tpu_custom_call.1} parent=1 // pred_check
      _
    $region3: #{tpu_custom_call.1} parent=1 // pred_check_branch
      %20 = sbr.rel (0) target = $region5
    $region4: #{tpu_custom_call.1} parent=1 // pred_region
      %s22 = ssub.s32 128, 128
      %23 = vsyncadd [#allocation4], %s22
      %s24 = sshll.u32 [#allocation3], 4
      %s25 = int_to_ptr.vmem [resolvable:$true] %s24
      %30 = dma.hbm_to_vmem [thread:$0]  %s0, 128, %s25, [#allocation4], 64, 64, 4
    $region5: #{tpu_custom_call.1} parent=1 // pred_fallthru
      _
    // Predicated region
    $region6: #{tpu_custom_call.1} parent=1 // pred_check
      _
    $region7: #{tpu_custom_call.1} parent=1 // pred_check_branch
      %32 = sbr.rel (0) target = $region9
    $region8: #{tpu_custom_call.1} parent=1 // pred_region
      %s34 = ssub.s32 128, 128
      %35 = vsyncadd [#allocation7], %s34
      %s36 = sshll.u32 [#allocation6], 4
      %s37 = int_to_ptr.vmem [resolvable:$true] %s36
      %42 = dma.hbm_to_vmem [thread:$0]  %s1, 128, %s37, [#allocation7], 64, 64, 4
    $region9: #{tpu_custom_call.1} parent=1 // pred_fallthru
      _
    // Predicated region
    $region10: #{tpu_custom_call.1} parent=1 // pred_check
      _
    $region11: #{tpu_custom_call.1} parent=1 // pred_check_branch
      %44 = sbr.rel (0) target = $region13
    $region12: #{tpu_custom_call.1} parent=1 // pred_region
      _
    $region13: #{tpu_custom_call.1} parent=1 // pred_fallthru
      _
    // Predicated region
    $region14: #{tpu_custom_call.1} parent=1 // pred_check
      _
    $region15: #{tpu_custom_call.1} parent=1 // pred_check_branch
      %46 = sbr.rel (0) target = $region17
    $region16: #{tpu_custom_call.1} parent=1 // pred_region
      _
    $region17: #{tpu_custom_call.1} parent=1 // pred_fallthru
      _
    // Predicated region
    $region18: #{tpu_custom_call.1} parent=1 // pred_check
      _
    $region19: #{tpu_custom_call.1} parent=1 // pred_check_branch
      %48 = sbr.rel (0) target = $region21
    $region20: #{tpu_custom_call.1} parent=1 // pred_region
      %s50 = ssub.s32 1024, 1024
      %51 = vsyncadd [#allocation7], %s50
      %s52 = sshll.u32 [#allocation8], 4
      %s53 = int_to_ptr.vmem [resolvable:$true] %s52
      %58 = dma.hbm_to_vmem [thread:$0]  %s4, 1024, %s53, [#allocation7], 64, 64, 4
    $region21: #{tpu_custom_call.1} parent=1 // pred_fallthru
      _
    // Predicated region
    $region22: #{tpu_custom_call.1} parent=1 // pred_check
      _
    $region23: #{tpu_custom_call.1} parent=1 // pred_check_branch
      %60 = sbr.rel (0) target = $region25
    $region24: #{tpu_custom_call.1} parent=1 // pred_region
      _
    $region25: #{tpu_custom_call.1} parent=1 // pred_fallthru
      _
    // Predicated region
    $region26: #{tpu_custom_call.1} parent=1 // pred_check
      _
    $region27: #{tpu_custom_call.1} parent=1 // pred_check_branch
      %62 = sbr.rel (0) target = $region29
    $region28: #{tpu_custom_call.1} parent=1 // pred_region
      _
    $region29: #{tpu_custom_call.1} parent=1 // pred_fallthru
      _
    // Predicated region
    $region30: #{tpu_custom_call.1} parent=1 // pred_check
      _
    $region31: #{tpu_custom_call.1} parent=1 // pred_check_branch
      %64 = sbr.rel (0) target = $region33
    $region32: #{tpu_custom_call.1} parent=1 // pred_region
      _
    $region33: #{tpu_custom_call.1} parent=1 // pred_fallthru
      _
    // Predicated region
    $region34: #{tpu_custom_call.1} parent=1 // pred_check
      _
    $region35: #{tpu_custom_call.1} parent=1 // pred_check_branch
      %66 = sbr.rel (0) target = $region37
    $region36: #{tpu_custom_call.1} parent=1 // pred_region
      _
    $region37: #{tpu_custom_call.1} parent=1 // pred_fallthru
      _
    // Predicated region
    $region38: #{tpu_custom_call.1} parent=1 // pred_check
      _
    $region39: #{tpu_custom_call.1} parent=1 // pred_check_branch
      %68 = sbr.rel (0) target = $region41
    $region40: #{tpu_custom_call.1} parent=1 // pred_region
      %69 = dma.done [#allocation4], 128
    $region41: #{tpu_custom_call.1} parent=1 // pred_fallthru
      _
    // Predicated region
    $region42: #{tpu_custom_call.1} parent=1 // pred_check
      _
    $region43: #{tpu_custom_call.1} parent=1 // pred_check_branch
      %71 = sbr.rel (0) target = $region45
    $region44: #{tpu_custom_call.1} parent=1 // pred_region
      %72 = dma.done [#allocation7], 128
    $region45: #{tpu_custom_call.1} parent=1 // pred_fallthru
      _
    // Predicated region
    $region46: #{tpu_custom_call.1} parent=1 // pred_check
      _
    $region47: #{tpu_custom_call.1} parent=1 // pred_check_branch
      %74 = sbr.rel (0) target = $region49
    $region48: #{tpu_custom_call.1} parent=1 // pred_region
      %75 = dma.done [#allocation7], 1024
    $region49: #{tpu_custom_call.1} parent=1 // pred_fallthru
      _
    %v77 = vld [vmem:[#allocation3] sm:$0xf]
    %v78 = vld [vmem:[#allocation3 + $0x4] sm:$0xf]
    %v79 = vld [vmem:[%s2] sm:$0xf]
    %v80 = vld [vmem:[%s2 + $0x4] sm:$0xf]
    %v81 = vld [vmem:[%s3] sm:$0x1]
    %v83 = vlaneseq
    %v84 = vshrl.u32 %v83, 7
    %v85 = vsub.s32 0, %v84
    %v86 = vrot.slane %v81, %v85
    %v90 = vunpack.c.l.b16 %v77
    %v91 = vunpack.c.l.b16 %v78
    %v92 = vpack.c.b16 %v91, %v90
    %v95 = vunpack.c.l.b16 %v79
    %v96 = vunpack.c.l.b16 %v80
    %v97 = vpack.c.b16 %v96, %v95
    %vm99 = vcmask 130048
    %v101 = vsel %vm99, %v92, 0
    %103 = vmatprep.subr.bf16.mxu0 0
    %104 = vmatpush1.bf16.msra.mxu0 %v97
    %105 = vmatprep.subr.bf16.mxu0 0
    %106 = vmatpush1.bf16.msra.mxu0 0
    %107 = vmatprep.subr.bf16.mxu0 0
    %108 = vmatpush1.bf16.msra.mxu0 0
    %109 = vmatprep.subr.bf16.mxu0 0
    %110 = vmatpush1.bf16.msra.mxu0 0
    %111 = vmatprep.subr.bf16.mxu0 0
    %112 = vmatpush1.bf16.msra.mxu0 0
    %113 = vmatprep.subr.bf16.mxu0 0
    %114 = vmatpush1.bf16.msra.mxu0 0
    %115 = vmatprep.subr.bf16.mxu0 0
    %116 = vmatpush1.bf16.msra.mxu0 0
    %117 = vmatprep.subr.bf16.mxu0 0
    %118 = vmatpush1.bf16.msra.mxu0 0
    %119 = vmatprep.subr.bf16.mxu0 0
    %120 = vmatpush1.bf16.msra.mxu0 0
    %121 = vmatprep.subr.bf16.mxu0 0
    %122 = vmatpush1.bf16.msra.mxu0 0
    %123 = vmatprep.subr.bf16.mxu0 0
    %124 = vmatpush1.bf16.msra.mxu0 0
    %125 = vmatprep.subr.bf16.mxu0 0
    %126 = vmatpush1.bf16.msra.mxu0 0
    %127 = vmatprep.subr.bf16.mxu0 0
    %128 = vmatpush1.bf16.msra.mxu0 0
    %129 = vmatprep.subr.bf16.mxu0 0
    %130 = vmatpush1.bf16.msra.mxu0 0
    %131 = vmatprep.subr.bf16.mxu0 0
    %132 = vmatpush1.bf16.msra.mxu0 0
    %133 = vmatprep.subr.bf16.mxu0 0
    %134 = vmatpush1.bf16.msra.mxu0 0
    %135 = vmatprep.mubr.bf16.mxu0 0
    %136 = vmatmul.mubr.bf16.gmra.mrb[0].mxu0 %v101
    %v137 = vpop.f32.mrb[0].mxu0
    %v138 = vadd.f32 %v86, %v137
    %v139 = vpop.f32.mrb[0].mxu0
    %v140 = vpop.f32.mrb[0].mxu0
    %v141 = vadd.f32 %v86, %v140
    %v142 = vpop.f32.mrb[0].mxu0
    %143 = vdwg.mxu0
    %v144 = vmax.f32 %v138, 0.0
    %v145 = vmax.f32 %v141, 0.0
    %v146 = vpack.c.bf16 %v145, %v144
    %v147 = vld [vmem:[#allocation8] sm:$0xf]
    %v148 = vld [vmem:[#allocation8 + $0x4] sm:$0xf]
    %v149 = vld [vmem:[#allocation8 + $0x8] sm:$0xf]
    %v150 = vld [vmem:[#allocation8 + $0xc] sm:$0xf]
    %v151 = vld [vmem:[#allocation8 + $0x10] sm:$0xf]
    %v152 = vld [vmem:[#allocation8 + $0x14] sm:$0xf]
    %v153 = vld [vmem:[#allocation8 + $0x18] sm:$0xf]
    %v154 = vld [vmem:[#allocation8 + $0x1c] sm:$0xf]
    %v155 = vld [vmem:[#allocation8 + $0x20] sm:$0xf]
    %v156 = vld [vmem:[#allocation8 + $0x24] sm:$0xf]
    %v157 = vld [vmem:[#allocation8 + $0x28] sm:$0xf]
    %v158 = vld [vmem:[#allocation8 + $0x2c] sm:$0xf]
    %v159 = vld [vmem:[#allocation8 + $0x30] sm:$0xf]
    %v160 = vld [vmem:[#allocation8 + $0x34] sm:$0xf]
    %v161 = vld [vmem:[#allocation8 + $0x38] sm:$0xf]
    %v162 = vld [vmem:[#allocation8 + $0x3c] sm:$0xf]
    %v163 = vld [vmem:[#allocation6] sm:$0xf]
    %v164 = vld [vmem:[#allocation6 + $0x4] sm:$0xf]
    %v165 = vld [vmem:[%s5] sm:$0xf]
    %v166 = vld [vmem:[%s5 + $0x4] sm:$0xf]
    %v169 = vunpack.c.l.b16 %v163
    %v170 = vunpack.c.l.b16 %v164
    %v171 = vpack.c.b16 %v170, %v169
    %v174 = vunpack.c.l.b16 %v165
    %v175 = vunpack.c.l.b16 %v166
    %v176 = vpack.c.b16 %v175, %v174
    %v179 = vsel %vm99, %v171, 0
    %181 = vmatprep.subr.bf16.mxu0 0
    %182 = vmatpush1.bf16.msra.mxu0 %v176
    %183 = vmatprep.subr.bf16.mxu0 0
    %184 = vmatpush1.bf16.msra.mxu0 0
    %185 = vmatprep.subr.bf16.mxu0 0
    %186 = vmatpush1.bf16.msra.mxu0 0
    %187 = vmatprep.subr.bf16.mxu0 0
    %188 = vmatpush1.bf16.msra.mxu0 0
    %189 = vmatprep.subr.bf16.mxu0 0
    %190 = vmatpush1.bf16.msra.mxu0 0
    %191 = vmatprep.subr.bf16.mxu0 0
    %192 = vmatpush1.bf16.msra.mxu0 0
    %193 = vmatprep.subr.bf16.mxu0 0
    %194 = vmatpush1.bf16.msra.mxu0 0
    %195 = vmatprep.subr.bf16.mxu0 0
    %196 = vmatpush1.bf16.msra.mxu0 0
    %197 = vmatprep.subr.bf16.mxu0 0
    %198 = vmatpush1.bf16.msra.mxu0 0
    %199 = vmatprep.subr.bf16.mxu0 0
    %200 = vmatpush1.bf16.msra.mxu0 0
    %201 = vmatprep.subr.bf16.mxu0 0
    %202 = vmatpush1.bf16.msra.mxu0 0
    %203 = vmatprep.subr.bf16.mxu0 0
    %204 = vmatpush1.bf16.msra.mxu0 0
    %205 = vmatprep.subr.bf16.mxu0 0
    %206 = vmatpush1.bf16.msra.mxu0 0
    %207 = vmatprep.subr.bf16.mxu0 0
    %208 = vmatpush1.bf16.msra.mxu0 0
    %209 = vmatprep.subr.bf16.mxu0 0
    %210 = vmatpush1.bf16.msra.mxu0 0
    %211 = vmatprep.subr.bf16.mxu0 0
    %212 = vmatpush1.bf16.msra.mxu0 0
    %213 = vmatprep.mubr.bf16.mxu0 0
    %214 = vmatmul.mubr.bf16.gmra.mrb[0].mxu0 %v179
    %v215 = vpop.f32.mrb[0].mxu0
    %v216 = vadd.f32 0.0, %v215
    %v217 = vpop.f32.mrb[0].mxu0
    %v218 = vpop.f32.mrb[0].mxu0
    %v219 = vadd.f32 0.0, %v218
    %v220 = vpop.f32.mrb[0].mxu0
    %221 = vdwg.mxu0
    %v238 = vunpack.c.l.b16 %v147
    %v239 = vunpack.c.l.b16 %v148
    %v240 = vunpack.c.l.b16 %v149
    %v241 = vunpack.c.l.b16 %v150
    %v242 = vunpack.c.l.b16 %v151
    %v243 = vunpack.c.l.b16 %v152
    %v244 = vunpack.c.l.b16 %v153
    %v245 = vunpack.c.l.b16 %v154
    %v246 = vunpack.c.l.b16 %v155
    %v247 = vunpack.c.l.b16 %v156
    %v248 = vunpack.c.l.b16 %v157
    %v249 = vunpack.c.l.b16 %v158
    %v250 = vunpack.c.l.b16 %v159
    %v251 = vunpack.c.l.b16 %v160
    %v252 = vunpack.c.l.b16 %v161
    %v253 = vunpack.c.l.b16 %v162
    %v254 = vpack.c.b16 %v239, %v238
    %v255 = vpack.c.b16 %v241, %v240
    %v256 = vpack.c.b16 %v243, %v242
    %v257 = vpack.c.b16 %v245, %v244
    %v258 = vpack.c.b16 %v247, %v246
    %v259 = vpack.c.b16 %v249, %v248
    %v260 = vpack.c.b16 %v251, %v250
    %v261 = vpack.c.b16 %v253, %v252
    %270 = vmatprep.subr.bf16.mxu0 0
    %271 = vmatpush1.bf16.msra.mxu0 %v254
    %272 = vmatprep.subr.bf16.mxu0 0
    %273 = vmatpush1.bf16.msra.mxu0 %v255
    %274 = vmatprep.subr.bf16.mxu0 0
    %275 = vmatpush1.bf16.msra.mxu0 %v256
    %276 = vmatprep.subr.bf16.mxu0 0
    %277 = vmatpush1.bf16.msra.mxu0 %v257
    %278 = vmatprep.subr.bf16.mxu0 0
    %279 = vmatpush1.bf16.msra.mxu0 %v258
    %280 = vmatprep.subr.bf16.mxu0 0
    %281 = vmatpush1.bf16.msra.mxu0 %v259
    %282 = vmatprep.subr.bf16.mxu0 0
    %283 = vmatpush1.bf16.msra.mxu0 %v260
    %284 = vmatprep.subr.bf16.mxu0 0
    %285 = vmatpush1.bf16.msra.mxu0 %v261
    %286 = vmatprep.subr.bf16.mxu0 0
    %287 = vmatpush1.bf16.msra.mxu0 0
    %288 = vmatprep.subr.bf16.mxu0 0
    %289 = vmatpush1.bf16.msra.mxu0 0
    %290 = vmatprep.subr.bf16.mxu0 0
    %291 = vmatpush1.bf16.msra.mxu0 0
    %292 = vmatprep.subr.bf16.mxu0 0
    %293 = vmatpush1.bf16.msra.mxu0 0
    %294 = vmatprep.subr.bf16.mxu0 0
    %295 = vmatpush1.bf16.msra.mxu0 0
    %296 = vmatprep.subr.bf16.mxu0 0
    %297 = vmatpush1.bf16.msra.mxu0 0
    %298 = vmatprep.subr.bf16.mxu0 0
    %299 = vmatpush1.bf16.msra.mxu0 0
    %300 = vmatprep.subr.bf16.mxu0 0
    %301 = vmatpush1.bf16.msra.mxu0 0
    %302 = vmatprep.mubr.bf16.mxu0 0
    %303 = vmatmul.mubr.bf16.gmra.mrb[0].mxu0 %v146
    %v304 = vpop.f32.mrb[0].mxu0
    %v305 = vadd.f32 %v216, %v304
    %v306 = vpop.f32.mrb[0].mxu0
    %v307 = vpop.f32.mrb[0].mxu0
    %v308 = vadd.f32 %v219, %v307
    %v309 = vpop.f32.mrb[0].mxu0
    %310 = vdwg.mxu0
    %v311 = vld [vmem:[%s6] sm:$0x1]
    %v313 = vlaneseq
    %v314 = vshrl.u32 %v313, 7
    %v315 = vsub.s32 0, %v314
    %v316 = vrot.slane %v311, %v315
    %v318 = vadd.f32 %v305, %v316
    %v319 = vadd.f32 %v308, %v316
    %v320 = vmax.f32 %v318, 0.0
    %v321 = vmax.f32 %v319, 0.0
    %v322 = vpack.c.bf16 %v321, %v320
    %v323 = vld [vmem:[%s7] sm:$0x1]
    %v324 = vld [vmem:[#allocation2] sm:$0x1]
    %326 = vset.pattern.permute.xlu0 0
    %327 = vperm.xlu0 %326, %v324
    %v328 = vpop.permute.xlu0 %327
    %v330 = vlaneseq
    %v331 = vshrl.u32 %v330, 7
    %v332 = vsub.s32 0, %v331
    %v333 = vrot.slane %v328, %v332
    %334 = vmatprep.subr.bf16.mxu0 0
    %335 = vmatpush1.bf16.xpose.msra.mxu0 %v322
    %336 = vmatprep.subr.bf16.mxu0 0
    %337 = vmatpush1.bf16.xpose.msra.mxu0 0
    %338 = vmatprep.subr.bf16.mxu0 0
    %339 = vmatpush1.bf16.xpose.msra.mxu0 0
    %340 = vmatprep.subr.bf16.mxu0 0
    %341 = vmatpush1.bf16.xpose.msra.mxu0 0
    %342 = vmatprep.subr.bf16.mxu0 0
    %343 = vmatpush1.bf16.xpose.msra.mxu0 0
    %344 = vmatprep.subr.bf16.mxu0 0
    %345 = vmatpush1.bf16.xpose.msra.mxu0 0
    %346 = vmatprep.subr.bf16.mxu0 0
    %347 = vmatpush1.bf16.xpose.msra.mxu0 0
    %348 = vmatprep.subr.bf16.mxu0 0
    %349 = vmatpush1.bf16.xpose.msra.mxu0 0
    %350 = vmatprep.subr.bf16.mxu0 0
    %351 = vmatpush1.bf16.xpose.msra.mxu0 0
    %352 = vmatprep.subr.bf16.mxu0 0
    %353 = vmatpush1.bf16.xpose.msra.mxu0 0
    %354 = vmatprep.subr.bf16.mxu0 0
    %355 = vmatpush1.bf16.xpose.msra.mxu0 0
    %356 = vmatprep.subr.bf16.mxu0 0
    %357 = vmatpush1.bf16.xpose.msra.mxu0 0
    %358 = vmatprep.subr.bf16.mxu0 0
    %359 = vmatpush1.bf16.xpose.msra.mxu0 0
    %360 = vmatprep.subr.bf16.mxu0 0
    %361 = vmatpush1.bf16.xpose.msra.mxu0 0
    %362 = vmatprep.subr.bf16.mxu0 0
    %363 = vmatpush1.bf16.xpose.msra.mxu0 0
    %364 = vmatprep.subr.bf16.mxu0 0
    %365 = vmatpush1.bf16.xpose.msra.mxu0 0
    %366 = vmatprep.mubr.bf16.mxu0 0
    %367 = vmatmul.mubr.bf16.gmra.mrb[0].mxu0 %v323
    %v368 = vpop.f32.mrb[0].mxu0
    %v369 = vadd.f32 %v333, %v368
    %v370 = vpop.f32.mrb[0].mxu0
    %v371 = vpop.f32.mrb[0].mxu0
    %v372 = vpop.f32.mrb[0].mxu0
    %373 = vdwg.mxu0
    %v374 = vxor.u32 %v369, 2147483648
    %v375 = vmul.f32 %v374, 1.442695
    %v376 = vpow.pop %v375
    %v377 = vadd.f32 %v376, 1.0
    %v378 = vrcp.pop %v377
    %v379 = vmul.f32 1.0, %v378
    %vm380 = vcmask 122880
    %381 = vst.msk [vmem:[#allocation9] sm:$0x1] %vm380, %v379
    // Predicated region
    $region50: #{tpu_custom_call.1} parent=1 // pred_check
      _
    $region51: #{tpu_custom_call.1} parent=1 // pred_check_branch
      %383 = sbr.rel (0) target = $region53
    $region52: #{tpu_custom_call.1} parent=1 // pred_region
      %s385 = ssub.s32 16, 16
      %386 = vsyncadd [#allocation5], %s385
      %s388 = sshll.u32 [#allocation9], 4
      %s389 = int_to_ptr.vmem [resolvable:$true] %s388
      %391 = dma.vmem_to_hbm [thread:$0]  %s389, 16, %s9, [#allocation5]
    $region53: #{tpu_custom_call.1} parent=1 // pred_fallthru
      _
    // Predicated region
    $region54: #{tpu_custom_call.1} parent=1 // pred_check
      _
    $region55: #{tpu_custom_call.1} parent=1 // pred_check_branch
      %393 = sbr.rel (0) target = $region57
    $region56: #{tpu_custom_call.1} parent=1 // pred_region
      %394 = dma.done [#allocation5], 16
    $region57: #{tpu_custom_call.1} parent=1 // pred_fallthru
      _
    %395 = vsyncpa [#allocation4], 1
    %396 = vsyncpa [#allocation7], 1
    %397 = vsyncpa [#allocation5], 1

</llo_original>
